<compile_context>
chip_gen: v6e
topology: v6e:2x2x1
jax: 0.10.0
libtpu: 0.0.40
codegen_flags: <defaults>
</compile_context>

<pallas_src>
import functools

import jax
import jax.numpy as jnp
from jax.experimental import pallas as pl
from jax.experimental.pallas import tpu as pltpu


# ---------------------------------------------------------------------------
# Kernel
# ---------------------------------------------------------------------------
def _critic_kernel(obs_ref, act_ref, w1_ref, w2_ref, b12_ref, w3row_ref, out_ref):
    h1 = w1_ref.shape[1]          # 48
    h2 = w2_ref.shape[1]          # 24
    act_dim = act_ref.shape[1]

    b1 = b12_ref[:, :h1]                     # [1, 48]
    b2 = b12_ref[:, h1:h1 + h2]              # [1, 24]
    w3x = w3row_ref[:, :h2]                  # [1, 24]
    w3a = w3row_ref[:, h2:h2 + act_dim]      # [1, act_dim]
    b3 = w3row_ref[:, h2 + act_dim:]         # [1, 1]

    # Layer 1 (MXU): [tb, obs_dim] @ [obs_dim, 48] + b1 -> relu (f32 accumulate)
    x = jnp.dot(obs_ref[...], w1_ref[...], preferred_element_type=jnp.float32)
    x = jnp.maximum(x + b1, 0.0)

    # Layer 2 (MXU): [tb, 48] @ [48, 24] + b2 -> relu
    x = jnp.dot(x, w2_ref[...], preferred_element_type=jnp.float32)
    x = jnp.maximum(x + b2, 0.0)

    # Layer 3, computed transposed on the MXU (attention-style A @ B^T dims):
    #   q_row[0, b] = sum_d w3x[0, d] * x[b, d] + sum_d w3a[0, d] * act[b, d] + b3
    # Keeps the feature reductions off the XLU and yields batch on LANES, so
    # the store and the writeback DMA are lane-dense.
    qx = jnp.einsum("od,bd->ob", w3x, x, preferred_element_type=jnp.float32)
    qa = jnp.einsum("od,bd->ob", w3a, act_ref[...],
                    preferred_element_type=jnp.float32)
    out_ref[...] = (qx + qa + b3).astype(out_ref.dtype)


# ---------------------------------------------------------------------------
# Wrapper
# ---------------------------------------------------------------------------
def _round_up(n, m):
    return ((n + m - 1) // m) * m


def _choose_batch_tile(batch, block_rows):
    """Lane-granular (multiple-of-128) batch tile.

    Prefers >=2 grid steps whenever the padded batch spans >=2 lane granules
    (so the "parallel" batch axis can shard across both v7x TensorCores) and
    caps the tile at `block_rows` so VMEM stays bounded for huge batches.
    """
    block_rows = max(128, _round_up(block_rows, 128))
    b_pad = _round_up(batch, 128)
    if b_pad < 256:
        return b_pad                                   # single (possibly partial) tile
    return min(block_rows, _round_up(pl.cdiv(b_pad, 2), 128))


def prepare_params(params, dtype=jnp.float32):
    """One-time relayout of PyTorch-convention params into kernel layout.

    Use dtype=jnp.bfloat16 together with producer-emitted bf16 obs/action
    (do NOT cast f32 inputs in the wrapper — that is an extra HBM pass).
    """
    w1_t = jnp.asarray(params["w1"], dtype).T                        # [obs_dim, 48]
    w2_t = jnp.asarray(params["w2"], dtype).T                        # [48, 24]
    b12 = jnp.concatenate([jnp.asarray(params["b1"], dtype),
                           jnp.asarray(params["b2"], dtype)]).reshape(1, -1)   # [1, 72]
    w3 = jnp.asarray(params["w3"], dtype)                            # [1, 24 + act_dim]
    b3 = jnp.asarray(params["b3"], dtype)                            # [1]
    w3row = jnp.concatenate([w3[0], b3]).reshape(1, -1)              # [1, 24+act_dim+1]
    return {"w1_t": w1_t, "w2_t": w2_t, "b12": b12, "w3row": w3row}


@functools.partial(jax.jit, static_argnames=("block_rows",))
def critic_forward(observation, action, prepared, *, block_rows=4096):
    """observation: [B, obs_dim], action: [B, act_dim] -> Q-values [B, 1] (f32)."""
    B, obs_dim = observation.shape
    act_dim = action.shape[1]

    w1_t = prepared["w1_t"]
    w2_t = prepared["w2_t"]
    b12 = prepared["b12"]
    w3row = prepared["w3row"]
    h1, h2 = w1_t.shape[1], w2_t.shape[1]

    tb = _choose_batch_tile(B, block_rows)
    grid = (pl.cdiv(B, tb),)

    batch_map = lambda i: (i, 0)     # streamed per-grid-step tiles
    const_map = lambda i: (0, 0)     # VMEM-resident across all grid steps

    in_specs = [
        pl.BlockSpec((tb, obs_dim), batch_map),
        pl.BlockSpec((tb, act_dim), batch_map),
        pl.BlockSpec(w1_t.shape, const_map),
        pl.BlockSpec(w2_t.shape, const_map),
        pl.BlockSpec(b12.shape, const_map),
        pl.BlockSpec(w3row.shape, const_map),
    ]
    # Lane-dense output: one [1, tb] row per grid step over a (1, B) array.
    out_specs = pl.BlockSpec((1, tb), lambda i: (0, i))

    # VMEM budget: lane-padded streamed blocks (double-buffered) + f32
    # activations + resident weights + headroom; capped under v7x's 64 MiB.
    lane = 128
    in_bytes = observation.dtype.itemsize
    streamed = 2 * 2 * tb * lane * in_bytes            # obs + act blocks
    out_buf = 2 * 8 * tb * 4                           # (1, tb) block, sublane-padded
    interm = 2 * tb * lane * 4                         # layer-1/2 f32 activations
    weights = 512 * 1024
    vmem_limit = int(min(60 * 2**20,
                         max(32 * 2**20,
                             streamed + out_buf + interm + weights + (8 << 20))))

    flops = 2 * B * (obs_dim * h1 + h1 * h2 + h2 + act_dim)
    bytes_accessed = B * ((obs_dim + act_dim) * in_bytes + 4) + sum(
        int(v.size) * v.dtype.itemsize for v in (w1_t, w2_t, b12, w3row))

    q_row = pl.pallas_call(
        _critic_kernel,
        out_shape=jax.ShapeDtypeStruct((1, B), jnp.float32),
        grid=grid,
        in_specs=in_specs,
        out_specs=out_specs,
        compiler_params=pltpu.CompilerParams(
            dimension_semantics=("parallel",),      # megacore-shard batch axis (v7x)
            vmem_limit_bytes=vmem_limit,
        ),
        cost_estimate=pl.CostEstimate(
            flops=int(flops), transcendentals=0,
            bytes_accessed=int(bytes_accessed)),
    )(observation, action, w1_t, w2_t, b12, w3row)

    return q_row.reshape(B, 1)


# ---------------------------------------------------------------------------
# Init + pure-JAX reference
# ---------------------------------------------------------------------------
def init_params(key, observation_dim, action_dim):
    """Deterministic init matching nn.Linear default (uniform +- 1/sqrt(fan_in))."""
    def linear(k, fan_in, fan_out):
        kw, kb = jax.random.split(k)
        bound = 1.0 / jnp.sqrt(jnp.float32(fan_in))
        w = jax.random.uniform(kw, (fan_out, fan_in), jnp.float32, -bound, bound)
        b = jax.random.uniform(kb, (fan_out,), jnp.float32, -bound, bound)
        return w, b

    k1, k2, k3 = jax.random.split(key, 3)
    w1, b1 = linear(k1, observation_dim, 48)
    w2, b2 = linear(k2, 48, 24)
    w3, b3 = linear(k3, 24 + action_dim, 1)
    return {"w1": w1, "b1": b1, "w2": w2, "b2": b2, "w3": w3, "b3": b3}


def critic_reference(observation, action, params):
    """Pure-JAX reference mirroring the PyTorch forward exactly."""
    x = observation @ params["w1"].T + params["b1"]
    x = jnp.maximum(x, 0.0)
    x = x @ params["w2"].T + params["b2"]
    x = jnp.maximum(x, 0.0)
    x = jnp.concatenate([x, action], axis=1)
    return x @ params["w3"].T + params["b3"]


# ---------------------------------------------------------------------------
# Test
# ---------------------------------------------------------------------------
if __name__ == "__main__":
    observation_dim = 24   # BipedalWalker observation size
    action_dim = 4         # BipedalWalker action size

    key = jax.random.PRNGKey(0)
    k_obs, k_act, k_par = jax.random.split(key, 3)
    params = init_params(k_par, observation_dim, action_dim)
    prepared = prepare_params(params)

    # --- small batch, single grid step ------------------------------------
    batch = 8
    obs = jax.random.normal(k_obs, (batch, observation_dim), jnp.float32)
    act = jax.random.normal(k_act, (batch, action_dim), jnp.float32)

    q = jax.block_until_ready(critic_forward(obs, act, prepared))
    q_ref = critic_reference(obs, act, params)
    assert q.shape == (batch, 1)
    assert jnp.allclose(q, q_ref, atol=1e-4, rtol=1e-5), "small-batch mismatch"

    # --- non-divisible batch: two grid steps + masked partial tail tile ----
    batch2 = 300
    k_obs2, k_act2 = jax.random.split(jax.random.PRNGKey(1))
    obs2 = jax.random.normal(k_obs2, (batch2, observation_dim), jnp.float32)
    act2 = jax.random.normal(k_act2, (batch2, action_dim), jnp.float32)

    q2 = jax.block_until_ready(
        critic_forward(obs2, act2, prepared, block_rows=256))
    q2_ref = critic_reference(obs2, act2, params)
    assert q2.shape == (batch2, 1)
    assert jnp.allclose(q2, q2_ref, atol=1e-4, rtol=1e-5), "gridded-batch mismatch"

    # --- default (large-tile) path: 2 parallel grid steps, partial tail ----
    batch3 = 1000
    k_obs3, k_act3 = jax.random.split(jax.random.PRNGKey(2))
    obs3 = jax.random.normal(k_obs3, (batch3, observation_dim), jnp.float32)
    act3 = jax.random.normal(k_act3, (batch3, action_dim), jnp.float32)

    q3 = jax.block_until_ready(critic_forward(obs3, act3, prepared))
    q3_ref = critic_reference(obs3, act3, params)
    assert q3.shape == (batch3, 1)
    assert jnp.allclose(q3, q3_ref, atol=1e-4, rtol=1e-5), "default-tile mismatch"

    # --- producer-emits-bf16 path: bf16 streams + bf16 weights, f32 accum --
    prepared_bf16 = prepare_params(params, dtype=jnp.bfloat16)
    qb = jax.block_until_ready(
        critic_forward(obs2.astype(jnp.bfloat16), act2.astype(jnp.bfloat16),
                       prepared_bf16, block_rows=256))
    assert jnp.max(jnp.abs(qb - q2_ref)) < 0.2, "bf16-path mismatch"

    print("KERNEL_OK")
</pallas_src>

<mosaic_0001>
module attributes {stable_mosaic.version = 11 : i64} {
  func.func @_critic_kernel(%arg0: i32, %arg1: memref<128x24xf32, #tpu.memory_space<vmem>>, %arg2: memref<128x4xf32, #tpu.memory_space<vmem>>, %arg3: memref<24x48xf32, #tpu.memory_space<vmem>>, %arg4: memref<48x24xf32, #tpu.memory_space<vmem>>, %arg5: memref<1x72xf32, #tpu.memory_space<vmem>>, %arg6: memref<1x29xf32, #tpu.memory_space<vmem>>, %arg7: memref<1x128xf32, #tpu.memory_space<vmem>>) attributes {dimension_semantics = [#tpu.dimension_semantics<parallel>], iteration_bounds = array<i64: 1>, scalar_prefetch = 0 : i64, scratch_operands = 0 : i64, tpu.core_type = #tpu.core_type<tc>, window_params = [{transform_indices = @transform_0, window_bounds = array<i64: 128, 24>}, {transform_indices = @transform_1, window_bounds = array<i64: 128, 4>}, {pipeline_mode = #tpu.pipeline_mode<synchronous>, transform_indices = @transform_2, window_bounds = array<i64: 24, 48>}, {pipeline_mode = #tpu.pipeline_mode<synchronous>, transform_indices = @transform_3, window_bounds = array<i64: 48, 24>}, {pipeline_mode = #tpu.pipeline_mode<synchronous>, transform_indices = @transform_4, window_bounds = array<i64: 1, 72>}, {pipeline_mode = #tpu.pipeline_mode<synchronous>, transform_indices = @transform_5, window_bounds = array<i64: 1, 29>}, {transform_indices = @transform_6, window_bounds = array<i64: 1, 128>}]} {
    %c0 = arith.constant 0 : index
    %c0_0 = arith.constant 0 : index
    %0 = vector.load %arg5[%c0, %c0_0] : memref<1x72xf32, #tpu.memory_space<vmem>>, vector<1x48xf32>
    %c0_1 = arith.constant 0 : index
    %c48 = arith.constant 48 : index
    %1 = vector.load %arg5[%c0_1, %c48] : memref<1x72xf32, #tpu.memory_space<vmem>>, vector<1x24xf32>
    %c0_2 = arith.constant 0 : index
    %c0_3 = arith.constant 0 : index
    %2 = vector.load %arg6[%c0_2, %c0_3] : memref<1x29xf32, #tpu.memory_space<vmem>>, vector<1x24xf32>
    %c0_4 = arith.constant 0 : index
    %c24 = arith.constant 24 : index
    %3 = vector.load %arg6[%c0_4, %c24] : memref<1x29xf32, #tpu.memory_space<vmem>>, vector<1x4xf32>
    %c0_5 = arith.constant 0 : index
    %c28 = arith.constant 28 : index
    %4 = vector.load %arg6[%c0_5, %c28] : memref<1x29xf32, #tpu.memory_space<vmem>>, vector<1x1xf32>
    %c0_6 = arith.constant 0 : index
    %c0_7 = arith.constant 0 : index
    %5 = vector.load %arg1[%c0_6, %c0_7] : memref<128x24xf32, #tpu.memory_space<vmem>>, vector<128x24xf32>
    %c0_8 = arith.constant 0 : index
    %c0_9 = arith.constant 0 : index
    %6 = vector.load %arg3[%c0_8, %c0_9] : memref<24x48xf32, #tpu.memory_space<vmem>>, vector<24x48xf32>
    %cst = arith.constant dense<0.000000e+00> : vector<128x48xf32>
    %7 = tpu.matmul %5, %6, %cst {dimension_numbers = #tpu.dot_dimension_numbers<[1], [0], [0], [1], [0, 0, 1, 1], [], []>} : vector<128x24xf32>, vector<24x48xf32>, vector<128x48xf32> -> vector<128x48xf32>
    %8 = vector.broadcast %0 : vector<1x48xf32> to vector<128x48xf32>
    %9 = arith.addf %7, %8 : vector<128x48xf32>
    %cst_10 = arith.constant 0.000000e+00 : f32
    %10 = vector.broadcast %cst_10 : f32 to vector<128x48xf32>
    %11 = arith.maximumf %9, %10 : vector<128x48xf32>
    %c0_11 = arith.constant 0 : index
    %c0_12 = arith.constant 0 : index
    %12 = vector.load %arg4[%c0_11, %c0_12] : memref<48x24xf32, #tpu.memory_space<vmem>>, vector<48x24xf32>
    %cst_13 = arith.constant dense<0.000000e+00> : vector<128x24xf32>
    %13 = tpu.matmul %11, %12, %cst_13 {dimension_numbers = #tpu.dot_dimension_numbers<[1], [0], [0], [1], [0, 0, 1, 1], [], []>} : vector<128x48xf32>, vector<48x24xf32>, vector<128x24xf32> -> vector<128x24xf32>
    %14 = vector.broadcast %1 : vector<1x24xf32> to vector<128x24xf32>
    %15 = arith.addf %13, %14 : vector<128x24xf32>
    %cst_14 = arith.constant 0.000000e+00 : f32
    %16 = vector.broadcast %cst_14 : f32 to vector<128x24xf32>
    %17 = arith.maximumf %15, %16 : vector<128x24xf32>
    "tpu.trace_start"() <{level = 10 : i32, message = "od,bd->ob"}> : () -> ()
    %cst_15 = arith.constant dense<0.000000e+00> : vector<1x128xf32>
    %18 = tpu.matmul %2, %17, %cst_15 {dimension_numbers = #tpu.dot_dimension_numbers<[1], [1], [0], [0], [0, 0, 1, 0], [], []>} : vector<1x24xf32>, vector<128x24xf32>, vector<1x128xf32> -> vector<1x128xf32>
    "tpu.trace_stop"() : () -> ()
    %c0_16 = arith.constant 0 : index
    %c0_17 = arith.constant 0 : index
    %19 = vector.load %arg2[%c0_16, %c0_17] : memref<128x4xf32, #tpu.memory_space<vmem>>, vector<128x4xf32>
    "tpu.trace_start"() <{level = 10 : i32, message = "od,bd->ob"}> : () -> ()
    %cst_18 = arith.constant dense<0.000000e+00> : vector<1x128xf32>
    %20 = tpu.matmul %3, %19, %cst_18 {dimension_numbers = #tpu.dot_dimension_numbers<[1], [1], [0], [0], [0, 0, 1, 0], [], []>} : vector<1x4xf32>, vector<128x4xf32>, vector<1x128xf32> -> vector<1x128xf32>
    "tpu.trace_stop"() : () -> ()
    %21 = arith.addf %18, %20 : vector<1x128xf32>
    %22 = vector.broadcast %4 : vector<1x1xf32> to vector<1x128xf32>
    %23 = arith.addf %21, %22 : vector<1x128xf32>
    %c0_19 = arith.constant 0 : index
    %c0_20 = arith.constant 0 : index
    %24 = vector.load %arg7[%c0_19, %c0_20] : memref<1x128xf32, #tpu.memory_space<vmem>>, vector<1x128xf32>
    tpu.vector_store %arg7[%c0_19, %c0_20], %23 {strides = array<i32>} : memref<1x128xf32, #tpu.memory_space<vmem>>, vector<1x128xf32>,
    return
  }
  func.func @transform_0(%arg0: i32) -> (i32, i32) {
    %c0_i32 = arith.constant 0 : i32
    %c0_i32_0 = arith.constant 0 : i32
    return %arg0, %c0_i32 : i32, i32
  }
  func.func @transform_1(%arg0: i32) -> (i32, i32) {
    %c0_i32 = arith.constant 0 : i32
    %c0_i32_0 = arith.constant 0 : i32
    return %arg0, %c0_i32 : i32, i32
  }
  func.func @transform_2(%arg0: i32) -> (i32, i32) {
    %c0_i32 = arith.constant 0 : i32
    %c0_i32_0 = arith.constant 0 : i32
    %c0_i32_1 = arith.constant 0 : i32
    return %c0_i32, %c0_i32_0 : i32, i32
  }
  func.func @transform_3(%arg0: i32) -> (i32, i32) {
    %c0_i32 = arith.constant 0 : i32
    %c0_i32_0 = arith.constant 0 : i32
    %c0_i32_1 = arith.constant 0 : i32
    return %c0_i32, %c0_i32_0 : i32, i32
  }
  func.func @transform_4(%arg0: i32) -> (i32, i32) {
    %c0_i32 = arith.constant 0 : i32
    %c0_i32_0 = arith.constant 0 : i32
    %c0_i32_1 = arith.constant 0 : i32
    return %c0_i32, %c0_i32_0 : i32, i32
  }
  func.func @transform_5(%arg0: i32) -> (i32, i32) {
    %c0_i32 = arith.constant 0 : i32
    %c0_i32_0 = arith.constant 0 : i32
    %c0_i32_1 = arith.constant 0 : i32
    return %c0_i32, %c0_i32_0 : i32, i32
  }
  func.func @transform_6(%arg0: i32) -> (i32, i32) {
    %c0_i32 = arith.constant 0 : i32
    %c0_i32_0 = arith.constant 0 : i32
    return %c0_i32, %arg0 : i32, i32
  }
}

</mosaic_0001>

<llo_original>
// kernel: critic_forward.1
$region0: #{critic_forward.1}
  #allocation0 [shape = 'u32[]', space=smem, size = 0x4, offset = 0x4, fixed_abs, tag = 'smem constant byte address 0x4 - core index']
  #allocation1 [shape = 'u32[144,128]{1,0:T(1,128)}', space=vmem, size = 0x12000, scoped, tag = 'internal scratch']
  %s0 = inlined_call_operand.vmem [shape: f32[8,24], index: 0, kind: input, shape index: {}]
  %s1 = inlined_call_operand.vmem [shape: f32[8,4], index: 1, kind: input, shape index: {}]
  %s2 = inlined_call_operand.vmem [shape: f32[24,48], index: 2, kind: input, shape index: {}]
  %s3 = inlined_call_operand.vmem [shape: f32[48,24], index: 3, kind: input, shape index: {}]
  %s4 = inlined_call_operand.vmem [shape: f32[1,72], index: 4, kind: input, shape index: {}]
  %s5 = inlined_call_operand.vmem [shape: f32[1,29], index: 5, kind: input, shape index: {}]
  %s6 = inlined_call_operand.hbm [shape: f32[1,8], index: 6, kind: output, shape index: {}]
  %s7 = sld [smem:[#allocation0]]
  $region34: #{critic_forward.1} parent=0
    _
  %s9 = ssub.s32 1, %s7
  %s10 = scalar_select 0, %s9, %s7
  $region1: #{critic_forward.1} parent=0
    #allocation2 [shape = 'u8[512]{0}', space=vmem, size = 0x400, scoped, tag = 'output window, operand 0, single buffered']
    #allocation3 [shape = 's32[1]{0}', space=sflag, size = 0x4, scoped, tag = 'scoped memory for critic_forward.1']
    %11 = vsyncpa [#allocation3], 0
    // Predicated region
    $region2: #{critic_forward.1} parent=1 // pred_check
      _
    $region3: #{critic_forward.1} parent=1 // pred_check_branch
      %13 = sbr.rel (0) target = $region5
    $region4: #{critic_forward.1} parent=1 // pred_region
      _
    $region5: #{critic_forward.1} parent=1 // pred_fallthru
      _
    // Predicated region
    $region6: #{critic_forward.1} parent=1 // pred_check
      _
    $region7: #{critic_forward.1} parent=1 // pred_check_branch
      %15 = sbr.rel (0) target = $region9
    $region8: #{critic_forward.1} parent=1 // pred_region
      _
    $region9: #{critic_forward.1} parent=1 // pred_fallthru
      _
    // Predicated region
    $region10: #{critic_forward.1} parent=1 // pred_check
      _
    $region11: #{critic_forward.1} parent=1 // pred_check_branch
      %17 = sbr.rel (0) target = $region13
    $region12: #{critic_forward.1} parent=1 // pred_region
      _
    $region13: #{critic_forward.1} parent=1 // pred_fallthru
      _
    // Predicated region
    $region14: #{critic_forward.1} parent=1 // pred_check
      _
    $region15: #{critic_forward.1} parent=1 // pred_check_branch
      %19 = sbr.rel (0) target = $region17
    $region16: #{critic_forward.1} parent=1 // pred_region
      _
    $region17: #{critic_forward.1} parent=1 // pred_fallthru
      _
    // Predicated region
    $region18: #{critic_forward.1} parent=1 // pred_check
      _
    $region19: #{critic_forward.1} parent=1 // pred_check_branch
      %21 = sbr.rel (0) target = $region21
    $region20: #{critic_forward.1} parent=1 // pred_region
      _
    $region21: #{critic_forward.1} parent=1 // pred_fallthru
      _
    // Predicated region
    $region22: #{critic_forward.1} parent=1 // pred_check
      _
    $region23: #{critic_forward.1} parent=1 // pred_check_branch
      %23 = sbr.rel (0) target = $region25
    $region24: #{critic_forward.1} parent=1 // pred_region
      _
    $region25: #{critic_forward.1} parent=1 // pred_fallthru
      _
    %v24 = vld [vmem:[%s4] sm:$0x1]
    %v25 = vld [vmem:[%s5] sm:$0x1]
    %v26 = vld [vmem:[%s0] sm:$0xff]
    %v27 = vld [vmem:[%s0 + $0x8] sm:$0xff]
    %v28 = vld [vmem:[%s0 + $0x10] sm:$0xff]
    %v29 = vld [vmem:[%s0 + $0x18] sm:$0xff]
    %v30 = vld [vmem:[%s0 + $0x20] sm:$0xff]
    %v31 = vld [vmem:[%s0 + $0x28] sm:$0xff]
    %v32 = vld [vmem:[%s0 + $0x30] sm:$0xff]
    %v33 = vld [vmem:[%s0 + $0x38] sm:$0xff]
    %v34 = vld [vmem:[%s0 + $0x40] sm:$0xff]
    %v35 = vld [vmem:[%s0 + $0x48] sm:$0xff]
    %v36 = vld [vmem:[%s0 + $0x50] sm:$0xff]
    %v37 = vld [vmem:[%s0 + $0x58] sm:$0xff]
    %v38 = vld [vmem:[%s0 + $0x60] sm:$0xff]
    %v39 = vld [vmem:[%s0 + $0x68] sm:$0xff]
    %v40 = vld [vmem:[%s0 + $0x70] sm:$0xff]
    %v41 = vld [vmem:[%s0 + $0x78] sm:$0xff]
    %v42 = vld [vmem:[%s2] sm:$0xff]
    %v43 = vld [vmem:[%s2 + $0x8] sm:$0xff]
    %v44 = vld [vmem:[%s2 + $0x10] sm:$0xff]
    %v46 = vlaneseq
    %v47 = vshrl.u32 %v46, 7
    %v48 = vsub.s32 0, %v47
    %v49 = vrot.slane %v24, %v48
    %vm51 = vcmask 195584
    %v53 = vsel %vm51, %v26, 0
    %v56 = vsel %vm51, %v27, 0
    %v59 = vsel %vm51, %v28, 0
    %v62 = vsel %vm51, %v29, 0
    %v65 = vsel %vm51, %v30, 0
    %v68 = vsel %vm51, %v31, 0
    %v71 = vsel %vm51, %v32, 0
    %v74 = vsel %vm51, %v33, 0
    %v77 = vsel %vm51, %v34, 0
    %v80 = vsel %vm51, %v35, 0
    %v83 = vsel %vm51, %v36, 0
    %v86 = vsel %vm51, %v37, 0
    %v89 = vsel %vm51, %v38, 0
    %v92 = vsel %vm51, %v39, 0
    %v95 = vsel %vm51, %v40, 0
    %v98 = vsel %vm51, %v41, 0
    %100 = vmatprep.subr.mxu0 0.0
    %101 = vmatpush1.msra.mxu0 0.0
    %102 = vmatprep.subr.mxu0 0.0
    %103 = vmatpush1.msra.mxu0 0.0
    %104 = vmatprep.subr.mxu0 0.0
    %105 = vmatpush1.msra.mxu0 0.0
    %106 = vmatprep.subr.mxu0 0.0
    %107 = vmatpush1.msra.mxu0 0.0
    %108 = vmatprep.subr.mxu0 0.0
    %109 = vmatpush1.msra.mxu0 0.0
    %110 = vmatprep.subr.mxu0 0.0
    %111 = vmatpush1.msra.mxu0 0.0
    %112 = vmatprep.subr.mxu0 0.0
    %113 = vmatpush1.msra.mxu0 0.0
    %114 = vmatprep.subr.mxu0 0.0
    %115 = vmatpush1.msra.mxu0 0.0
    %116 = vmatprep.subr.mxu0 0.0
    %117 = vmatpush1.msra.mxu0 0.0
    %118 = vmatprep.subr.mxu0 0.0
    %119 = vmatpush1.msra.mxu0 0.0
    %120 = vmatprep.subr.mxu0 0.0
    %121 = vmatpush1.msra.mxu0 0.0
    %122 = vmatprep.subr.mxu0 0.0
    %123 = vmatpush1.msra.mxu0 0.0
    %124 = vmatprep.subr.mxu0 0.0
    %125 = vmatpush1.msra.mxu0 0.0
    %126 = vmatprep.subr.mxu0 0.0
    %127 = vmatpush1.msra.mxu0 %v44
    %128 = vmatprep.subr.mxu0 0.0
    %129 = vmatpush1.msra.mxu0 %v43
    %130 = vmatprep.subr.mxu0 0.0
    %131 = vmatpush1.msra.mxu0 %v42
    %132 = vmatprep.subr.mxu0 0.0
    %133 = vmatpush2.msra.mxu0 0.0
    %134 = vmatprep.subr.mxu0 0.0
    %135 = vmatpush2.msra.mxu0 0.0
    %136 = vmatprep.subr.mxu0 0.0
    %137 = vmatpush2.msra.mxu0 0.0
    %138 = vmatprep.subr.mxu0 0.0
    %139 = vmatpush2.msra.mxu0 0.0
    %140 = vmatprep.subr.mxu0 0.0
    %141 = vmatpush2.msra.mxu0 0.0
    %142 = vmatprep.subr.mxu0 0.0
    %143 = vmatpush2.msra.mxu0 0.0
    %144 = vmatprep.subr.mxu0 0.0
    %145 = vmatpush2.msra.mxu0 0.0
    %146 = vmatprep.subr.mxu0 0.0
    %147 = vmatpush2.msra.mxu0 0.0
    %148 = vmatprep.subr.mxu0 0.0
    %149 = vmatpush2.msra.mxu0 0.0
    %150 = vmatprep.subr.mxu0 0.0
    %151 = vmatpush2.msra.mxu0 0.0
    %152 = vmatprep.subr.mxu0 0.0
    %153 = vmatpush2.msra.mxu0 0.0
    %154 = vmatprep.subr.mxu0 0.0
    %155 = vmatpush2.msra.mxu0 0.0
    %156 = vmatprep.subr.mxu0 0.0
    %157 = vmatpush2.msra.mxu0 0.0
    %158 = vmatprep.subr.mxu0 0.0
    %159 = vmatpush2.msra.mxu0 0.0
    %160 = vmatprep.subr.mxu0 0.0
    %161 = vmatpush2.msra.mxu0 0.0
    %162 = vmatprep.subr.mxu0 0.0
    %163 = vmatpush2.msra.mxu0 0.0
    %164 = vmatprep.mubr.f32.mxu0 0.0
    %165 = vmatmul.mubr.f32.gmra.mxu0 %v53
    %v166 = vpop.f32.mrf.mxu0
    %v167 = vadd.f32 %v49, %v166
    %v168 = vpop.f32.mrf.mxu0
    %169 = vmatprep.mubr.f32.mxu0 0.0
    %170 = vmatmul.mubr.f32.gmra.mxu0 %v56
    %v171 = vpop.f32.mrf.mxu0
    %v172 = vadd.f32 %v49, %v171
    %v173 = vpop.f32.mrf.mxu0
    %174 = vmatprep.mubr.f32.mxu0 0.0
    %175 = vmatmul.mubr.f32.gmra.mxu0 %v59
    %v176 = vpop.f32.mrf.mxu0
    %v177 = vadd.f32 %v49, %v176
    %v178 = vpop.f32.mrf.mxu0
    %179 = vmatprep.mubr.f32.mxu0 0.0
    %180 = vmatmul.mubr.f32.gmra.mxu0 %v62
    %v181 = vpop.f32.mrf.mxu0
    %v182 = vadd.f32 %v49, %v181
    %v183 = vpop.f32.mrf.mxu0
    %184 = vmatprep.mubr.f32.mxu0 0.0
    %185 = vmatmul.mubr.f32.gmra.mxu0 %v65
    %v186 = vpop.f32.mrf.mxu0
    %v187 = vadd.f32 %v49, %v186
    %v188 = vpop.f32.mrf.mxu0
    %189 = vmatprep.mubr.f32.mxu0 0.0
    %190 = vmatmul.mubr.f32.gmra.mxu0 %v68
    %v191 = vpop.f32.mrf.mxu0
    %v192 = vadd.f32 %v49, %v191
    %v193 = vpop.f32.mrf.mxu0
    %194 = vmatprep.mubr.f32.mxu0 0.0
    %195 = vmatmul.mubr.f32.gmra.mxu0 %v71
    %v196 = vpop.f32.mrf.mxu0
    %v197 = vadd.f32 %v49, %v196
    %v198 = vpop.f32.mrf.mxu0
    %199 = vmatprep.mubr.f32.mxu0 0.0
    %200 = vmatmul.mubr.f32.gmra.mxu0 %v74
    %v201 = vpop.f32.mrf.mxu0
    %v202 = vadd.f32 %v49, %v201
    %v203 = vpop.f32.mrf.mxu0
    %204 = vmatprep.mubr.f32.mxu0 0.0
    %205 = vmatmul.mubr.f32.gmra.mxu0 %v77
    %v206 = vpop.f32.mrf.mxu0
    %v207 = vadd.f32 %v49, %v206
    %v208 = vpop.f32.mrf.mxu0
    %209 = vmatprep.mubr.f32.mxu0 0.0
    %210 = vmatmul.mubr.f32.gmra.mxu0 %v80
    %v211 = vpop.f32.mrf.mxu0
    %v212 = vadd.f32 %v49, %v211
    %v213 = vpop.f32.mrf.mxu0
    %214 = vmatprep.mubr.f32.mxu0 0.0
    %215 = vmatmul.mubr.f32.gmra.mxu0 %v83
    %v216 = vpop.f32.mrf.mxu0
    %v217 = vadd.f32 %v49, %v216
    %v218 = vpop.f32.mrf.mxu0
    %219 = vmatprep.mubr.f32.mxu0 0.0
    %220 = vmatmul.mubr.f32.gmra.mxu0 %v86
    %v221 = vpop.f32.mrf.mxu0
    %v222 = vadd.f32 %v49, %v221
    %v223 = vpop.f32.mrf.mxu0
    %224 = vmatprep.mubr.f32.mxu0 0.0
    %225 = vmatmul.mubr.f32.gmra.mxu0 %v89
    %v226 = vpop.f32.mrf.mxu0
    %v227 = vadd.f32 %v49, %v226
    %v228 = vpop.f32.mrf.mxu0
    %229 = vmatprep.mubr.f32.mxu0 0.0
    %230 = vmatmul.mubr.f32.gmra.mxu0 %v92
    %v231 = vpop.f32.mrf.mxu0
    %v232 = vadd.f32 %v49, %v231
    %v233 = vpop.f32.mrf.mxu0
    %234 = vmatprep.mubr.f32.mxu0 0.0
    %235 = vmatmul.mubr.f32.gmra.mxu0 %v95
    %v236 = vpop.f32.mrf.mxu0
    %v237 = vadd.f32 %v49, %v236
    %v238 = vpop.f32.mrf.mxu0
    %239 = vmatprep.mubr.f32.mxu0 0.0
    %240 = vmatmul.mubr.f32.gmra.mxu0 %v98
    %v241 = vpop.f32.mrf.mxu0
    %v242 = vadd.f32 %v49, %v241
    %v243 = vpop.f32.mrf.mxu0
    %244 = vdwg.mxu0
    %v245 = vmax.f32 %v167, 0.0
    %v246 = vmax.f32 %v172, 0.0
    %v247 = vmax.f32 %v177, 0.0
    %v248 = vmax.f32 %v182, 0.0
    %v249 = vmax.f32 %v187, 0.0
    %v250 = vmax.f32 %v192, 0.0
    %v251 = vmax.f32 %v197, 0.0
    %v252 = vmax.f32 %v202, 0.0
    %v253 = vmax.f32 %v207, 0.0
    %v254 = vmax.f32 %v212, 0.0
    %v255 = vmax.f32 %v217, 0.0
    %v256 = vmax.f32 %v222, 0.0
    %v257 = vmax.f32 %v227, 0.0
    %v258 = vmax.f32 %v232, 0.0
    %v259 = vmax.f32 %v237, 0.0
    %v260 = vmax.f32 %v242, 0.0
    %v261 = vld [vmem:[%s3] sm:$0xff]
    %v262 = vld [vmem:[%s3 + $0x8] sm:$0xff]
    %v263 = vld [vmem:[%s3 + $0x10] sm:$0xff]
    %v264 = vld [vmem:[%s3 + $0x18] sm:$0xff]
    %v265 = vld [vmem:[%s3 + $0x20] sm:$0xff]
    %v266 = vld [vmem:[%s3 + $0x28] sm:$0xff]
    %267 = vrot.lane.b32.xlu0 %v49, 80
    %v268 = vpop.permute.xlu0 %267
    %vm270 = vcmask 392192
    %v272 = vsel %vm270, %v245, 0
    %v275 = vsel %vm270, %v246, 0
    %v278 = vsel %vm270, %v247, 0
    %v281 = vsel %vm270, %v248, 0
    %v284 = vsel %vm270, %v249, 0
    %v287 = vsel %vm270, %v250, 0
    %v290 = vsel %vm270, %v251, 0
    %v293 = vsel %vm270, %v252, 0
    %v296 = vsel %vm270, %v253, 0
    %v299 = vsel %vm270, %v254, 0
    %v302 = vsel %vm270, %v255, 0
    %v305 = vsel %vm270, %v256, 0
    %v308 = vsel %vm270, %v257, 0
    %v311 = vsel %vm270, %v258, 0
    %v314 = vsel %vm270, %v259, 0
    %v317 = vsel %vm270, %v260, 0
    %319 = vmatprep.subr.mxu0 0.0
    %320 = vmatpush1.msra.mxu0 0.0
    %321 = vmatprep.subr.mxu0 0.0
    %322 = vmatpush1.msra.mxu0 0.0
    %323 = vmatprep.subr.mxu0 0.0
    %324 = vmatpush1.msra.mxu0 0.0
    %325 = vmatprep.subr.mxu0 0.0
    %326 = vmatpush1.msra.mxu0 0.0
    %327 = vmatprep.subr.mxu0 0.0
    %328 = vmatpush1.msra.mxu0 0.0
    %329 = vmatprep.subr.mxu0 0.0
    %330 = vmatpush1.msra.mxu0 0.0
    %331 = vmatprep.subr.mxu0 0.0
    %332 = vmatpush1.msra.mxu0 0.0
    %333 = vmatprep.subr.mxu0 0.0
    %334 = vmatpush1.msra.mxu0 0.0
    %335 = vmatprep.subr.mxu0 0.0
    %336 = vmatpush1.msra.mxu0 0.0
    %337 = vmatprep.subr.mxu0 0.0
    %338 = vmatpush1.msra.mxu0 0.0
    %339 = vmatprep.subr.mxu0 0.0
    %340 = vmatpush1.msra.mxu0 %v266
    %341 = vmatprep.subr.mxu0 0.0
    %342 = vmatpush1.msra.mxu0 %v265
    %343 = vmatprep.subr.mxu0 0.0
    %344 = vmatpush1.msra.mxu0 %v264
    %345 = vmatprep.subr.mxu0 0.0
    %346 = vmatpush1.msra.mxu0 %v263
    %347 = vmatprep.subr.mxu0 0.0
    %348 = vmatpush1.msra.mxu0 %v262
    %349 = vmatprep.subr.mxu0 0.0
    %350 = vmatpush1.msra.mxu0 %v261
    %351 = vmatprep.subr.mxu0 0.0
    %352 = vmatpush2.msra.mxu0 0.0
    %353 = vmatprep.subr.mxu0 0.0
    %354 = vmatpush2.msra.mxu0 0.0
    %355 = vmatprep.subr.mxu0 0.0
    %356 = vmatpush2.msra.mxu0 0.0
    %357 = vmatprep.subr.mxu0 0.0
    %358 = vmatpush2.msra.mxu0 0.0
    %359 = vmatprep.subr.mxu0 0.0
    %360 = vmatpush2.msra.mxu0 0.0
    %361 = vmatprep.subr.mxu0 0.0
    %362 = vmatpush2.msra.mxu0 0.0
    %363 = vmatprep.subr.mxu0 0.0
    %364 = vmatpush2.msra.mxu0 0.0
    %365 = vmatprep.subr.mxu0 0.0
    %366 = vmatpush2.msra.mxu0 0.0
    %367 = vmatprep.subr.mxu0 0.0
    %368 = vmatpush2.msra.mxu0 0.0
    %369 = vmatprep.subr.mxu0 0.0
    %370 = vmatpush2.msra.mxu0 0.0
    %371 = vmatprep.subr.mxu0 0.0
    %372 = vmatpush2.msra.mxu0 0.0
    %373 = vmatprep.subr.mxu0 0.0
    %374 = vmatpush2.msra.mxu0 0.0
    %375 = vmatprep.subr.mxu0 0.0
    %376 = vmatpush2.msra.mxu0 0.0
    %377 = vmatprep.subr.mxu0 0.0
    %378 = vmatpush2.msra.mxu0 0.0
    %379 = vmatprep.subr.mxu0 0.0
    %380 = vmatpush2.msra.mxu0 0.0
    %381 = vmatprep.subr.mxu0 0.0
    %382 = vmatpush2.msra.mxu0 0.0
    %383 = vmatprep.mubr.f32.mxu0 0.0
    %384 = vmatmul.mubr.f32.gmra.mxu0 %v272
    %v385 = vpop.f32.mrf.mxu0
    %v386 = vadd.f32 %v268, %v385
    %v387 = vpop.f32.mrf.mxu0
    %388 = vmatprep.mubr.f32.mxu0 0.0
    %389 = vmatmul.mubr.f32.gmra.mxu0 %v275
    %v390 = vpop.f32.mrf.mxu0
    %v391 = vadd.f32 %v268, %v390
    %v392 = vpop.f32.mrf.mxu0
    %393 = vmatprep.mubr.f32.mxu0 0.0
    %394 = vmatmul.mubr.f32.gmra.mxu0 %v278
    %v395 = vpop.f32.mrf.mxu0
    %v396 = vadd.f32 %v268, %v395
    %v397 = vpop.f32.mrf.mxu0
    %398 = vmatprep.mubr.f32.mxu0 0.0
    %399 = vmatmul.mubr.f32.gmra.mxu0 %v281
    %v400 = vpop.f32.mrf.mxu0
    %v401 = vadd.f32 %v268, %v400
    %v402 = vpop.f32.mrf.mxu0
    %403 = vmatprep.mubr.f32.mxu0 0.0
    %404 = vmatmul.mubr.f32.gmra.mxu0 %v284
    %v405 = vpop.f32.mrf.mxu0
    %v406 = vadd.f32 %v268, %v405
    %v407 = vpop.f32.mrf.mxu0
    %408 = vmatprep.mubr.f32.mxu0 0.0
    %409 = vmatmul.mubr.f32.gmra.mxu0 %v287
    %v410 = vpop.f32.mrf.mxu0
    %v411 = vadd.f32 %v268, %v410
    %v412 = vpop.f32.mrf.mxu0
    %413 = vmatprep.mubr.f32.mxu0 0.0
    %414 = vmatmul.mubr.f32.gmra.mxu0 %v290
    %v415 = vpop.f32.mrf.mxu0
    %v416 = vadd.f32 %v268, %v415
    %v417 = vpop.f32.mrf.mxu0
    %418 = vmatprep.mubr.f32.mxu0 0.0
    %419 = vmatmul.mubr.f32.gmra.mxu0 %v293
    %v420 = vpop.f32.mrf.mxu0
    %v421 = vadd.f32 %v268, %v420
    %v422 = vpop.f32.mrf.mxu0
    %423 = vmatprep.mubr.f32.mxu0 0.0
    %424 = vmatmul.mubr.f32.gmra.mxu0 %v296
    %v425 = vpop.f32.mrf.mxu0
    %v426 = vadd.f32 %v268, %v425
    %v427 = vpop.f32.mrf.mxu0
    %428 = vmatprep.mubr.f32.mxu0 0.0
    %429 = vmatmul.mubr.f32.gmra.mxu0 %v299
    %v430 = vpop.f32.mrf.mxu0
    %v431 = vadd.f32 %v268, %v430
    %v432 = vpop.f32.mrf.mxu0
    %433 = vmatprep.mubr.f32.mxu0 0.0
    %434 = vmatmul.mubr.f32.gmra.mxu0 %v302
    %v435 = vpop.f32.mrf.mxu0
    %v436 = vadd.f32 %v268, %v435
    %v437 = vpop.f32.mrf.mxu0
    %438 = vmatprep.mubr.f32.mxu0 0.0
    %439 = vmatmul.mubr.f32.gmra.mxu0 %v305
    %v440 = vpop.f32.mrf.mxu0
    %v441 = vadd.f32 %v268, %v440
    %v442 = vpop.f32.mrf.mxu0
    %443 = vmatprep.mubr.f32.mxu0 0.0
    %444 = vmatmul.mubr.f32.gmra.mxu0 %v308
    %v445 = vpop.f32.mrf.mxu0
    %v446 = vadd.f32 %v268, %v445
    %v447 = vpop.f32.mrf.mxu0
    %448 = vmatprep.mubr.f32.mxu0 0.0
    %449 = vmatmul.mubr.f32.gmra.mxu0 %v311
    %v450 = vpop.f32.mrf.mxu0
    %v451 = vadd.f32 %v268, %v450
    %v452 = vpop.f32.mrf.mxu0
    %453 = vmatprep.mubr.f32.mxu0 0.0
    %454 = vmatmul.mubr.f32.gmra.mxu0 %v314
    %v455 = vpop.f32.mrf.mxu0
    %v456 = vadd.f32 %v268, %v455
    %v457 = vpop.f32.mrf.mxu0
    %458 = vmatprep.mubr.f32.mxu0 0.0
    %459 = vmatmul.mubr.f32.gmra.mxu0 %v317
    %v460 = vpop.f32.mrf.mxu0
    %v461 = vadd.f32 %v268, %v460
    %v462 = vpop.f32.mrf.mxu0
    %463 = vdwg.mxu0
    %v464 = vmax.f32 %v386, 0.0
    %v465 = vmax.f32 %v391, 0.0
    %v466 = vmax.f32 %v396, 0.0
    %v467 = vmax.f32 %v401, 0.0
    %v468 = vmax.f32 %v406, 0.0
    %v469 = vmax.f32 %v411, 0.0
    %v470 = vmax.f32 %v416, 0.0
    %v471 = vmax.f32 %v421, 0.0
    %v472 = vmax.f32 %v426, 0.0
    %v473 = vmax.f32 %v431, 0.0
    %v474 = vmax.f32 %v436, 0.0
    %v475 = vmax.f32 %v441, 0.0
    %v476 = vmax.f32 %v446, 0.0
    %v477 = vmax.f32 %v451, 0.0
    %v478 = vmax.f32 %v456, 0.0
    %v479 = vmax.f32 %v461, 0.0
    %v480 = vld [vmem:[%s1] sm:$0xff]
    %v481 = vld [vmem:[%s1 + $0x8] sm:$0xff]
    %v482 = vld [vmem:[%s1 + $0x10] sm:$0xff]
    %v483 = vld [vmem:[%s1 + $0x18] sm:$0xff]
    %v484 = vld [vmem:[%s1 + $0x20] sm:$0xff]
    %v485 = vld [vmem:[%s1 + $0x28] sm:$0xff]
    %v486 = vld [vmem:[%s1 + $0x30] sm:$0xff]
    %v487 = vld [vmem:[%s1 + $0x38] sm:$0xff]
    %v488 = vld [vmem:[%s1 + $0x40] sm:$0xff]
    %v489 = vld [vmem:[%s1 + $0x48] sm:$0xff]
    %v490 = vld [vmem:[%s1 + $0x50] sm:$0xff]
    %v491 = vld [vmem:[%s1 + $0x58] sm:$0xff]
    %v492 = vld [vmem:[%s1 + $0x60] sm:$0xff]
    %v493 = vld [vmem:[%s1 + $0x68] sm:$0xff]
    %v494 = vld [vmem:[%s1 + $0x70] sm:$0xff]
    %v495 = vld [vmem:[%s1 + $0x78] sm:$0xff]
    %v497 = vlaneseq
    %v498 = vshrl.u32 %v497, 7
    %v499 = vsub.s32 0, %v498
    %v500 = vrot.slane %v25, %v499
    %501 = vrot.lane.b32.xlu0 %v500, 104
    %v502 = vpop.permute.xlu0 %501
    %vm503 = vcmask 31744
    %v504 = vsel %vm503, %v502, 0
    %v507 = vsel %vm503, %v480, 0
    %v510 = vsel %vm503, %v481, 0
    %v513 = vsel %vm503, %v482, 0
    %v516 = vsel %vm503, %v483, 0
    %v519 = vsel %vm503, %v484, 0
    %v522 = vsel %vm503, %v485, 0
    %v525 = vsel %vm503, %v486, 0
    %v528 = vsel %vm503, %v487, 0
    %v531 = vsel %vm503, %v488, 0
    %v534 = vsel %vm503, %v489, 0
    %v537 = vsel %vm503, %v490, 0
    %v540 = vsel %vm503, %v491, 0
    %v543 = vsel %vm503, %v492, 0
    %v546 = vsel %vm503, %v493, 0
    %v549 = vsel %vm503, %v494, 0
    %v552 = vsel %vm503, %v495, 0
    %554 = vmatprep.subr.mxu0 0.0
    %555 = vmatpush1.xpose.msra.mxu0 %v552
    %556 = vmatprep.subr.mxu0 0.0
    %557 = vmatpush1.xpose.msra.mxu0 %v549
    %558 = vmatprep.subr.mxu0 0.0
    %559 = vmatpush1.xpose.msra.mxu0 %v546
    %560 = vmatprep.subr.mxu0 0.0
    %561 = vmatpush1.xpose.msra.mxu0 %v543
    %562 = vmatprep.subr.mxu0 0.0
    %563 = vmatpush1.xpose.msra.mxu0 %v540
    %564 = vmatprep.subr.mxu0 0.0
    %565 = vmatpush1.xpose.msra.mxu0 %v537
    %566 = vmatprep.subr.mxu0 0.0
    %567 = vmatpush1.xpose.msra.mxu0 %v534
    %568 = vmatprep.subr.mxu0 0.0
    %569 = vmatpush1.xpose.msra.mxu0 %v531
    %570 = vmatprep.subr.mxu0 0.0
    %571 = vmatpush1.xpose.msra.mxu0 %v528
    %572 = vmatprep.subr.mxu0 0.0
    %573 = vmatpush1.xpose.msra.mxu0 %v525
    %574 = vmatprep.subr.mxu0 0.0
    %575 = vmatpush1.xpose.msra.mxu0 %v522
    %576 = vmatprep.subr.mxu0 0.0
    %577 = vmatpush1.xpose.msra.mxu0 %v519
    %578 = vmatprep.subr.mxu0 0.0
    %579 = vmatpush1.xpose.msra.mxu0 %v516
    %580 = vmatprep.subr.mxu0 0.0
    %581 = vmatpush1.xpose.msra.mxu0 %v513
    %582 = vmatprep.subr.mxu0 0.0
    %583 = vmatpush1.xpose.msra.mxu0 %v510
    %584 = vmatprep.subr.mxu0 0.0
    %585 = vmatpush1.xpose.msra.mxu0 %v507
    %586 = vmatprep.subr.mxu0 0.0
    %587 = vmatpush2.xpose.msra.mxu0 0.0
    %588 = vmatprep.subr.mxu0 0.0
    %589 = vmatpush2.xpose.msra.mxu0 0.0
    %590 = vmatprep.subr.mxu0 0.0
    %591 = vmatpush2.xpose.msra.mxu0 0.0
    %592 = vmatprep.subr.mxu0 0.0
    %593 = vmatpush2.xpose.msra.mxu0 0.0
    %594 = vmatprep.subr.mxu0 0.0
    %595 = vmatpush2.xpose.msra.mxu0 0.0
    %596 = vmatprep.subr.mxu0 0.0
    %597 = vmatpush2.xpose.msra.mxu0 0.0
    %598 = vmatprep.subr.mxu0 0.0
    %599 = vmatpush2.xpose.msra.mxu0 0.0
    %600 = vmatprep.subr.mxu0 0.0
    %601 = vmatpush2.xpose.msra.mxu0 0.0
    %602 = vmatprep.subr.mxu0 0.0
    %603 = vmatpush2.xpose.msra.mxu0 0.0
    %604 = vmatprep.subr.mxu0 0.0
    %605 = vmatpush2.xpose.msra.mxu0 0.0
    %606 = vmatprep.subr.mxu0 0.0
    %607 = vmatpush2.xpose.msra.mxu0 0.0
    %608 = vmatprep.subr.mxu0 0.0
    %609 = vmatpush2.xpose.msra.mxu0 0.0
    %610 = vmatprep.subr.mxu0 0.0
    %611 = vmatpush2.xpose.msra.mxu0 0.0
    %612 = vmatprep.subr.mxu0 0.0
    %613 = vmatpush2.xpose.msra.mxu0 0.0
    %614 = vmatprep.subr.mxu0 0.0
    %615 = vmatpush2.xpose.msra.mxu0 0.0
    %616 = vmatprep.subr.mxu0 0.0
    %617 = vmatpush2.xpose.msra.mxu0 0.0
    %618 = vmatprep.mubr.f32.mxu0 0.0
    %619 = vmatmul.mubr.f32.gmra.mxu0 %v504
    %v620 = vpop.f32.mrf.mxu0
    %v621 = vadd.f32 0.0, %v620
    %v622 = vpop.f32.mrf.mxu0
    %623 = vdwg.mxu0
    %v624 = vsel %vm51, %v25, 0
    %v627 = vsel %vm51, %v464, 0
    %v630 = vsel %vm51, %v465, 0
    %v633 = vsel %vm51, %v466, 0
    %v636 = vsel %vm51, %v467, 0
    %v639 = vsel %vm51, %v468, 0
    %v642 = vsel %vm51, %v469, 0
    %v645 = vsel %vm51, %v470, 0
    %v648 = vsel %vm51, %v471, 0
    %v651 = vsel %vm51, %v472, 0
    %v654 = vsel %vm51, %v473, 0
    %v657 = vsel %vm51, %v474, 0
    %v660 = vsel %vm51, %v475, 0
    %v663 = vsel %vm51, %v476, 0
    %v666 = vsel %vm51, %v477, 0
    %v669 = vsel %vm51, %v478, 0
    %v672 = vsel %vm51, %v479, 0
    %674 = vmatprep.subr.mxu0 0.0
    %675 = vmatpush1.xpose.msra.mxu0 %v672
    %676 = vmatprep.subr.mxu0 0.0
    %677 = vmatpush1.xpose.msra.mxu0 %v669
    %678 = vmatprep.subr.mxu0 0.0
    %679 = vmatpush1.xpose.msra.mxu0 %v666
    %680 = vmatprep.subr.mxu0 0.0
    %681 = vmatpush1.xpose.msra.mxu0 %v663
    %682 = vmatprep.subr.mxu0 0.0
    %683 = vmatpush1.xpose.msra.mxu0 %v660
    %684 = vmatprep.subr.mxu0 0.0
    %685 = vmatpush1.xpose.msra.mxu0 %v657
    %686 = vmatprep.subr.mxu0 0.0
    %687 = vmatpush1.xpose.msra.mxu0 %v654
    %688 = vmatprep.subr.mxu0 0.0
    %689 = vmatpush1.xpose.msra.mxu0 %v651
    %690 = vmatprep.subr.mxu0 0.0
    %691 = vmatpush1.xpose.msra.mxu0 %v648
    %692 = vmatprep.subr.mxu0 0.0
    %693 = vmatpush1.xpose.msra.mxu0 %v645
    %694 = vmatprep.subr.mxu0 0.0
    %695 = vmatpush1.xpose.msra.mxu0 %v642
    %696 = vmatprep.subr.mxu0 0.0
    %697 = vmatpush1.xpose.msra.mxu0 %v639
    %698 = vmatprep.subr.mxu0 0.0
    %699 = vmatpush1.xpose.msra.mxu0 %v636
    %700 = vmatprep.subr.mxu0 0.0
    %701 = vmatpush1.xpose.msra.mxu0 %v633
    %702 = vmatprep.subr.mxu0 0.0
    %703 = vmatpush1.xpose.msra.mxu0 %v630
    %704 = vmatprep.subr.mxu0 0.0
    %705 = vmatpush1.xpose.msra.mxu0 %v627
    %706 = vmatprep.subr.mxu0 0.0
    %707 = vmatpush2.xpose.msra.mxu0 0.0
    %708 = vmatprep.subr.mxu0 0.0
    %709 = vmatpush2.xpose.msra.mxu0 0.0
    %710 = vmatprep.subr.mxu0 0.0
    %711 = vmatpush2.xpose.msra.mxu0 0.0
    %712 = vmatprep.subr.mxu0 0.0
    %713 = vmatpush2.xpose.msra.mxu0 0.0
    %714 = vmatprep.subr.mxu0 0.0
    %715 = vmatpush2.xpose.msra.mxu0 0.0
    %716 = vmatprep.subr.mxu0 0.0
    %717 = vmatpush2.xpose.msra.mxu0 0.0
    %718 = vmatprep.subr.mxu0 0.0
    %719 = vmatpush2.xpose.msra.mxu0 0.0
    %720 = vmatprep.subr.mxu0 0.0
    %721 = vmatpush2.xpose.msra.mxu0 0.0
    %722 = vmatprep.subr.mxu0 0.0
    %723 = vmatpush2.xpose.msra.mxu0 0.0
    %724 = vmatprep.subr.mxu0 0.0
    %725 = vmatpush2.xpose.msra.mxu0 0.0
    %726 = vmatprep.subr.mxu0 0.0
    %727 = vmatpush2.xpose.msra.mxu0 0.0
    %728 = vmatprep.subr.mxu0 0.0
    %729 = vmatpush2.xpose.msra.mxu0 0.0
    %730 = vmatprep.subr.mxu0 0.0
    %731 = vmatpush2.xpose.msra.mxu0 0.0
    %732 = vmatprep.subr.mxu0 0.0
    %733 = vmatpush2.xpose.msra.mxu0 0.0
    %734 = vmatprep.subr.mxu0 0.0
    %735 = vmatpush2.xpose.msra.mxu0 0.0
    %736 = vmatprep.subr.mxu0 0.0
    %737 = vmatpush2.xpose.msra.mxu0 0.0
    %738 = vmatprep.mubr.f32.mxu0 0.0
    %739 = vmatmul.mubr.f32.gmra.mxu0 %v624
    %v740 = vpop.f32.mrf.mxu0
    %v741 = vadd.f32 %v621, %v740
    %v742 = vpop.f32.mrf.mxu0
    %743 = vdwg.mxu0
    %744 = vset.pattern.permute.xlu0 28
    %745 = vperm.xlu0 %744, %v25
    %v746 = vpop.permute.xlu0 %745
    %v748 = vlaneseq
    %v749 = vshrl.u32 %v748, 7
    %v750 = vsub.s32 0, %v749
    %v751 = vrot.slane %v746, %v750
    %v752 = vadd.f32 %v741, %v751
    %753 = vst [vmem:[#allocation2] sm:$0x1] %v752
    // Predicated region
    $region26: #{critic_forward.1} parent=1 // pred_check
      _
    $region27: #{critic_forward.1} parent=1 // pred_check_branch
      %755 = sbr.rel (0) target = $region29
    $region28: #{critic_forward.1} parent=1 // pred_region
      %s757 = ssub.s32 16, 16
      %758 = vsyncadd [#allocation3], %s757
      %s760 = sshll.u32 [#allocation2], 4
      %s761 = int_to_ptr.vmem [resolvable:$true] %s760
      %763 = dma.vmem_to_hbm [thread:$0]  %s761, 16, %s6, [#allocation3]
    $region29: #{critic_forward.1} parent=1 // pred_fallthru
      _
    // Predicated region
    $region30: #{critic_forward.1} parent=1 // pred_check
      _
    $region31: #{critic_forward.1} parent=1 // pred_check_branch
      %765 = sbr.rel (0) target = $region33
    $region32: #{critic_forward.1} parent=1 // pred_region
      %766 = dma.done [#allocation3], 16
    $region33: #{critic_forward.1} parent=1 // pred_fallthru
      _
    %767 = vsyncpa [#allocation3], 1

</llo_original>
